<compile_context>
chip_gen: v6e
topology: v6e:2x2x1
jax: 0.10.0
libtpu: 0.0.40
codegen_flags: <defaults>
</compile_context>

<pallas_src>
import functools

import jax
import jax.numpy as jnp
from jax.experimental import pallas as pl
from jax.experimental.pallas import tpu as pltpu


def _gumbel_quant_kernel(zt_ref, w_ref, b_ref, et_ref, g_ref,
                         zq_ref, ind_ref, kl_ref, kl_acc,
                         *, n_embed, kl_weight, num_tokens):
    """One grid step processes TM tokens (tokens live on the lane axis).

    zt_ref  : (C, TM)  bf16       input tokens, transposed
    w_ref   : (N, C)   bf16       1x1-conv weight
    b_ref   : (N, 1)   f32        1x1-conv bias (column)
    et_ref  : (D, N)   bf16       embedding table, transposed
    g_ref   : (N, TM)  bf16       standard Gumbel noise
    zq_ref  : (D, TM)  f32        quantized tokens (tokens on lanes)
    ind_ref : (1, TM)  int32      code indices (tokens on lanes)
    kl_ref  : (1, 1)   f32        KL-diff scalar output
    kl_acc  : (1, 1)   f32 VMEM   KL running accumulator (scratch)
    """
    i = pl.program_id(0)
    tm = zt_ref.shape[1]

    # ---- logits^T = W @ z^T + b : (N, C) @ (C, TM), f32 accumulation --------
    logits_t = jnp.dot(w_ref[...], zt_ref[...],
                       preferred_element_type=jnp.float32) + b_ref[...]

    # ---- hard gumbel-softmax: argmax over codes (sublane axis) --------------
    scores_t = logits_t + g_ref[...].astype(jnp.float32)          # (N, TM)
    smax = jnp.max(scores_t, axis=0, keepdims=True)                # (1, TM)
    code_iota = jax.lax.broadcasted_iota(jnp.int32, (n_embed, tm), 0)
    idx_lane = jnp.min(jnp.where(scores_t == smax, code_iota, n_embed),
                       axis=0, keepdims=True)                      # (1, TM) int32

    # one-hot^T (N, TM) and codebook lookup on the MXU: (D, N) @ (N, TM)
    onehot_t = (code_iota == idx_lane).astype(et_ref.dtype)
    zq_ref[...] = jnp.dot(et_ref[...], onehot_t,
                          preferred_element_type=jnp.float32
                          ).astype(zq_ref.dtype)

    # ---- code indices (lane-dense store) ------------------------------------
    ind_ref[...] = idx_lane

    # ---- qy = softmax(logits); diff = kl_weight*mean(sum(qy*log(qy*N+eps))) -
    lmax = jnp.max(logits_t, axis=0, keepdims=True)                # (1, TM)
    el = jnp.exp(logits_t - lmax)                                  # (N, TM)
    qy = el / jnp.sum(el, axis=0, keepdims=True)                   # (N, TM)
    kl_tok = jnp.sum(qy * jnp.log(qy * float(n_embed) + 1e-10),
                     axis=0, keepdims=True)                        # (1, TM)
    partial = jnp.sum(kl_tok, axis=1, keepdims=True)               # (1, 1)

    @pl.when(i == 0)
    def _():
        kl_acc[...] = jnp.zeros_like(kl_acc)

    kl_acc[...] += partial

    @pl.when(i == pl.num_programs(0) - 1)
    def _():
        kl_ref[...] = kl_acc[...] * (kl_weight / float(num_tokens))


def _pick_tile_m(m, target):
    """Largest multiple of 128 that divides m, capped at `target`."""
    # TODO(synk): pad + mask ragged token counts instead of asserting.
    assert m % 128 == 0, "B*H*W must be a multiple of 128"
    t = min(target, m)
    t -= t % 128
    while m % t != 0:
        t -= 128
    return t


def gumbel_quantize(z_nchw, proj_w, proj_b, embed_w, noise_key,
                    *, temp=1.0, kl_weight=5e-4, tile_m=1024):
    """Forward pass of GumbelQuantizer (remap=None, use_vqinterface=True, hard).

    z_nchw    : (B, num_hiddens, H, W) f32
    proj_w    : (n_embed, num_hiddens)   1x1-conv weight (squeezed)
    proj_b    : (n_embed,)
    embed_w   : (n_embed, embedding_dim)
    noise_key : jax PRNG key for the Gumbel noise
    temp      : kept for interface parity; the hard forward value is tau-invariant.
    returns (z_q (B, D, H, W), diff scalar, (None, None, ind (B, H, W)))
    """
    del temp  # only affects gradients of the soft path
    B, C, H, W = z_nchw.shape
    N, Cw = proj_w.shape
    assert Cw == C
    D = embed_w.shape[1]
    M = B * H * W
    tm = _pick_tile_m(M, tile_m)

    # NCHW -> transposed tokens (C, M); stream matmul operands in bf16.
    z_t = jnp.transpose(z_nchw, (1, 0, 2, 3)).reshape(C, M).astype(jnp.bfloat16)
    w_nc = proj_w.astype(jnp.bfloat16)                          # (N, C)
    b_col = proj_b.reshape(N, 1).astype(jnp.float32)            # (N, 1)
    e_t = jnp.transpose(embed_w, (1, 0)).astype(jnp.bfloat16)   # (D, N)
    gumbel = jax.random.gumbel(noise_key, (N, M),
                               dtype=jnp.float32).astype(jnp.bfloat16)

    grid = (M // tm,)
    kernel = functools.partial(_gumbel_quant_kernel,
                               n_embed=N, kl_weight=float(kl_weight),
                               num_tokens=M)

    zq_t, ind_row, kl = pl.pallas_call(
        kernel,
        out_shape=(
            jax.ShapeDtypeStruct((D, M), jnp.float32),   # z_q^T  (tokens on lanes)
            jax.ShapeDtypeStruct((1, M), jnp.int32),     # indices (tokens on lanes)
            jax.ShapeDtypeStruct((1, 1), jnp.float32),   # KL scalar
        ),
        grid_spec=pltpu.PrefetchScalarGridSpec(
            num_scalar_prefetch=0,
            grid=grid,
            in_specs=[
                pl.BlockSpec((C, tm), lambda i: (0, i)),   # z^T tile (bf16)
                pl.BlockSpec((N, C), lambda i: (0, 0)),    # proj weight
                pl.BlockSpec((N, 1), lambda i: (0, 0)),    # proj bias (column)
                pl.BlockSpec((D, N), lambda i: (0, 0)),    # embedding^T
                pl.BlockSpec((N, tm), lambda i: (0, i)),   # Gumbel noise tile
            ],
            out_specs=[
                pl.BlockSpec((D, tm), lambda i: (0, i)),   # z_q^T tile
                pl.BlockSpec((1, tm), lambda i: (0, i)),   # indices tile
                pl.BlockSpec((1, 1), lambda i: (0, 0)),    # KL scalar
            ],
            scratch_shapes=[pltpu.VMEM((1, 1), jnp.float32)],  # KL accumulator
        ),
        compiler_params=pltpu.CompilerParams(
            dimension_semantics=("arbitrary",),   # KL accumulator serializes grid
            vmem_limit_bytes=48 * 1024 * 1024),
    )(z_t, w_nc, b_col, e_t, gumbel)

    z_q = jnp.transpose(zq_t.reshape(D, B, H, W), (1, 0, 2, 3))   # (B, D, H, W)
    ind = ind_row.reshape(B, H, W)                                # (B, H, W) int32
    diff = kl[0, 0]
    # use_vqinterface=True, return_logits=False
    return z_q, diff, (None, None, ind)


if __name__ == "__main__":
    # Module hyper-params (small, deterministic)
    num_hiddens = 32
    embedding_dim = 16
    n_embed = 64
    B, H, W = 2, 8, 8
    temp_init = 1.0
    kl_weight = 5e-4

    key = jax.random.PRNGKey(0)
    k_z, k_w, k_b, k_e, k_noise = jax.random.split(key, 5)

    # input (NCHW, matching nn.Conv2d convention)
    z = jax.random.normal(k_z, (B, num_hiddens, H, W), dtype=jnp.float32)

    # deterministic parameter init (shapes from __init__)
    proj_w = jax.random.normal(k_w, (n_embed, num_hiddens),
                               dtype=jnp.float32) * (1.0 / jnp.sqrt(num_hiddens))
    proj_b = jax.random.normal(k_b, (n_embed,), dtype=jnp.float32) * 0.01
    embed_w = jax.random.normal(k_e, (n_embed, embedding_dim), dtype=jnp.float32)

    z_q, diff, (_, _, ind) = gumbel_quantize(
        z, proj_w, proj_b, embed_w, k_noise,
        temp=temp_init, kl_weight=kl_weight)
    jax.block_until_ready((z_q, diff, ind))

    assert z_q.shape == (B, embedding_dim, H, W)
    assert ind.shape == (B, H, W) and ind.dtype == jnp.int32
    assert diff.shape == ()
    assert bool(jnp.all((ind >= 0) & (ind < n_embed)))

    # self-consistency: every quantized token must equal the (bf16) embedding
    # row selected by its code index.
    e_bf = embed_w.astype(jnp.bfloat16).astype(jnp.float32)
    zq_tok = jnp.transpose(z_q, (0, 2, 3, 1)).reshape(-1, embedding_dim)
    assert bool(jnp.allclose(zq_tok, e_bf[ind.reshape(-1)], atol=1e-3))

    # The KL term is independent of the Gumbel noise -> check against a
    # pure-JAX f32 reference (loose tol: kernel streams z / W in bf16).
    z_tok_f32 = jnp.transpose(z, (0, 2, 3, 1)).reshape(-1, num_hiddens)
    logits_ref = z_tok_f32 @ proj_w.T + proj_b
    qy_ref = jax.nn.softmax(logits_ref, axis=-1)
    diff_ref = kl_weight * jnp.mean(
        jnp.sum(qy_ref * jnp.log(qy_ref * n_embed + 1e-10), axis=-1))
    assert abs(float(diff) - float(diff_ref)) < 1e-5 + 0.05 * abs(float(diff_ref))

    print("KERNEL_OK")
</pallas_src>

<mosaic_0001>
module attributes {stable_mosaic.version = 11 : i64} {
  func.func @_gumbel_quant_kernel(%arg0: i32, %arg1: memref<32x128xbf16, #tpu.memory_space<vmem>>, %arg2: memref<64x32xbf16, #tpu.memory_space<vmem>>, %arg3: memref<64x1xf32, #tpu.memory_space<vmem>>, %arg4: memref<16x64xbf16, #tpu.memory_space<vmem>>, %arg5: memref<64x128xbf16, #tpu.memory_space<vmem>>, %arg6: memref<16x128xf32, #tpu.memory_space<vmem>>, %arg7: memref<1x128xi32, #tpu.memory_space<vmem>>, %arg8: memref<1x1xf32, #tpu.memory_space<vmem>>, %arg9: memref<1x1xf32, #tpu.memory_space<vmem>>) attributes {dimension_semantics = [#tpu.dimension_semantics<arbitrary>], iteration_bounds = array<i64: 1>, scalar_prefetch = 0 : i64, scratch_operands = 1 : i64, tpu.core_type = #tpu.core_type<tc>, window_params = [{transform_indices = @transform_0, window_bounds = array<i64: 32, 128>}, {pipeline_mode = #tpu.pipeline_mode<synchronous>, transform_indices = @transform_1, window_bounds = array<i64: 64, 32>}, {pipeline_mode = #tpu.pipeline_mode<synchronous>, transform_indices = @transform_2, window_bounds = array<i64: 64, 1>}, {pipeline_mode = #tpu.pipeline_mode<synchronous>, transform_indices = @transform_3, window_bounds = array<i64: 16, 64>}, {transform_indices = @transform_4, window_bounds = array<i64: 64, 128>}, {transform_indices = @transform_5, window_bounds = array<i64: 16, 128>}, {transform_indices = @transform_6, window_bounds = array<i64: 1, 128>}, {pipeline_mode = #tpu.pipeline_mode<synchronous>, transform_indices = @transform_7, window_bounds = array<i64: 1, 1>}]} {
    %c0 = arith.constant 0 : index
    %c0_0 = arith.constant 0 : index
    %0 = vector.load %arg2[%c0, %c0_0] : memref<64x32xbf16, #tpu.memory_space<vmem>>, vector<64x32xbf16>
    %c0_1 = arith.constant 0 : index
    %c0_2 = arith.constant 0 : index
    %1 = vector.load %arg1[%c0_1, %c0_2] : memref<32x128xbf16, #tpu.memory_space<vmem>>, vector<32x128xbf16>
    %cst = arith.constant dense<0.000000e+00> : vector<64x128xf32>
    %2 = tpu.matmul %0, %1, %cst {dimension_numbers = #tpu.dot_dimension_numbers<[1], [0], [0], [1], [0, 0, 1, 1], [], []>} : vector<64x32xbf16>, vector<32x128xbf16>, vector<64x128xf32> -> vector<64x128xf32>
    %c0_3 = arith.constant 0 : index
    %c0_4 = arith.constant 0 : index
    %3 = vector.load %arg3[%c0_3, %c0_4] : memref<64x1xf32, #tpu.memory_space<vmem>>, vector<64x1xf32>
    %4 = vector.broadcast %3 : vector<64x1xf32> to vector<64x128xf32>
    %5 = arith.addf %2, %4 : vector<64x128xf32>
    %c0_5 = arith.constant 0 : index
    %c0_6 = arith.constant 0 : index
    %6 = vector.load %arg5[%c0_5, %c0_6] : memref<64x128xbf16, #tpu.memory_space<vmem>>, vector<64x128xbf16>
    %7 = arith.extf %6 : vector<64x128xbf16> to vector<64x128xf32>
    %8 = arith.addf %5, %7 : vector<64x128xf32>
    %cst_7 = arith.constant dense<0xFF800000> : vector<128xf32>
    %9 = vector.multi_reduction <maximumf>, %8, %cst_7 [0] : vector<64x128xf32> to vector<128xf32>
    %10 = vector.shape_cast %9 : vector<128xf32> to vector<1x128xf32>
    %11 = tpu.iota {dimensions = array<i32: 0>} : vector<64x128xi32>
    %12 = vector.broadcast %10 : vector<1x128xf32> to vector<64x128xf32>
    %13 = arith.cmpf oeq, %8, %12 : vector<64x128xf32>
    %c64_i32 = arith.constant 64 : i32
    %14 = vector.broadcast %c64_i32 : i32 to vector<64x128xi32>
    %15 = arith.select %13, %11, %14 : vector<64x128xi1>, vector<64x128xi32>
    %cst_8 = arith.constant dense<2147483647> : vector<128xi32>
    %16 = vector.multi_reduction <minsi>, %15, %cst_8 [0] : vector<64x128xi32> to vector<128xi32>
    %17 = vector.shape_cast %16 : vector<128xi32> to vector<1x128xi32>
    %18 = vector.broadcast %17 : vector<1x128xi32> to vector<64x128xi32>
    %19 = arith.cmpi eq, %11, %18 : vector<64x128xi32>
    %20 = arith.extui %19 : vector<64x128xi1> to vector<64x128xi32>
    %21 = arith.sitofp %20 : vector<64x128xi32> to vector<64x128xf32>
    %22 = arith.truncf %21 : vector<64x128xf32> to vector<64x128xbf16>
    %c0_9 = arith.constant 0 : index
    %c0_10 = arith.constant 0 : index
    %23 = vector.load %arg4[%c0_9, %c0_10] : memref<16x64xbf16, #tpu.memory_space<vmem>>, vector<16x64xbf16>
    %cst_11 = arith.constant dense<0.000000e+00> : vector<16x128xf32>
    %24 = tpu.matmul %23, %22, %cst_11 {dimension_numbers = #tpu.dot_dimension_numbers<[1], [0], [0], [1], [0, 0, 1, 1], [], []>} : vector<16x64xbf16>, vector<64x128xbf16>, vector<16x128xf32> -> vector<16x128xf32>
    %c0_12 = arith.constant 0 : index
    %c0_13 = arith.constant 0 : index
    %25 = vector.load %arg6[%c0_12, %c0_13] : memref<16x128xf32, #tpu.memory_space<vmem>>, vector<16x128xf32>
    tpu.vector_store %arg6[%c0_12, %c0_13], %24 {strides = array<i32>} : memref<16x128xf32, #tpu.memory_space<vmem>>, vector<16x128xf32>,
    %c0_14 = arith.constant 0 : index
    %c0_15 = arith.constant 0 : index
    %26 = vector.load %arg7[%c0_14, %c0_15] : memref<1x128xi32, #tpu.memory_space<vmem>>, vector<1x128xi32>
    tpu.vector_store %arg7[%c0_14, %c0_15], %17 {strides = array<i32>} : memref<1x128xi32, #tpu.memory_space<vmem>>, vector<1x128xi32>,
    %cst_16 = arith.constant dense<0xFF800000> : vector<128xf32>
    %27 = vector.multi_reduction <maximumf>, %5, %cst_16 [0] : vector<64x128xf32> to vector<128xf32>
    %28 = vector.shape_cast %27 : vector<128xf32> to vector<1x128xf32>
    %29 = vector.broadcast %28 : vector<1x128xf32> to vector<64x128xf32>
    %30 = arith.subf %5, %29 : vector<64x128xf32>
    %31 = math.exp %30 : vector<64x128xf32>
    %cst_17 = arith.constant dense<0.000000e+00> : vector<128xf32>
    %32 = vector.multi_reduction <add>, %31, %cst_17 [0] : vector<64x128xf32> to vector<128xf32>
    %33 = vector.shape_cast %32 : vector<128xf32> to vector<1x128xf32>
    %34 = vector.broadcast %33 : vector<1x128xf32> to vector<64x128xf32>
    %35 = arith.divf %31, %34 : vector<64x128xf32>
    %cst_18 = arith.constant 6.400000e+01 : f32
    %36 = vector.broadcast %cst_18 : f32 to vector<64x128xf32>
    %37 = arith.mulf %35, %36 : vector<64x128xf32>
    %cst_19 = arith.constant 1.000000e-10 : f32
    %38 = vector.broadcast %cst_19 : f32 to vector<64x128xf32>
    %39 = arith.addf %37, %38 : vector<64x128xf32>
    %40 = math.log %39 : vector<64x128xf32>
    %41 = arith.mulf %35, %40 : vector<64x128xf32>
    %cst_20 = arith.constant dense<0.000000e+00> : vector<128xf32>
    %42 = vector.multi_reduction <add>, %41, %cst_20 [0] : vector<64x128xf32> to vector<128xf32>
    %43 = vector.shape_cast %42 : vector<128xf32> to vector<1x128xf32>
    %cst_21 = arith.constant dense<0.000000e+00> : vector<1xf32>
    %44 = vector.multi_reduction <add>, %43, %cst_21 [1] : vector<1x128xf32> to vector<1xf32>
    %45 = vector.shape_cast %44 : vector<1xf32> to vector<1x1xf32>
    %c0_i32 = arith.constant 0 : i32
    %46 = arith.cmpi eq, %arg0, %c0_i32 : i32
    %47 = arith.extui %46 : i1 to i32
    %c0_i32_22 = arith.constant 0 : i32
    %48 = arith.cmpi ne, %47, %c0_i32_22 : i32
    scf.if %48 {
      %cst_29 = arith.constant 0.000000e+00 : f32
      %55 = vector.broadcast %cst_29 : f32 to vector<1x1xf32>
      %c0_30 = arith.constant 0 : index
      %c0_31 = arith.constant 0 : index
      %56 = vector.load %arg9[%c0_30, %c0_31] : memref<1x1xf32, #tpu.memory_space<vmem>>, vector<1x1xf32>
      tpu.vector_store %arg9[%c0_30, %c0_31], %55 {strides = array<i32>} : memref<1x1xf32, #tpu.memory_space<vmem>>, vector<1x1xf32>,
    } else {
    }
    %c0_23 = arith.constant 0 : index
    %c0_24 = arith.constant 0 : index
    %49 = vector.load %arg9[%c0_23, %c0_24] : memref<1x1xf32, #tpu.memory_space<vmem>>, vector<1x1xf32>
    %50 = arith.addf %49, %45 : vector<1x1xf32>
    %c0_25 = arith.constant 0 : index
    %c0_26 = arith.constant 0 : index
    %51 = vector.load %arg9[%c0_25, %c0_26] : memref<1x1xf32, #tpu.memory_space<vmem>>, vector<1x1xf32>
    tpu.vector_store %arg9[%c0_25, %c0_26], %50 {strides = array<i32>} : memref<1x1xf32, #tpu.memory_space<vmem>>, vector<1x1xf32>,
    %c0_i32_27 = arith.constant 0 : i32
    %52 = arith.cmpi eq, %arg0, %c0_i32_27 : i32
    %53 = arith.extui %52 : i1 to i32
    %c0_i32_28 = arith.constant 0 : i32
    %54 = arith.cmpi ne, %53, %c0_i32_28 : i32
    scf.if %54 {
      %c0_29 = arith.constant 0 : index
      %c0_30 = arith.constant 0 : index
      %55 = vector.load %arg9[%c0_29, %c0_30] : memref<1x1xf32, #tpu.memory_space<vmem>>, vector<1x1xf32>
      %cst_31 = arith.constant 3.906250e-06 : f32
      %56 = vector.broadcast %cst_31 : f32 to vector<1x1xf32>
      %57 = arith.mulf %55, %56 : vector<1x1xf32>
      %c0_32 = arith.constant 0 : index
      %c0_33 = arith.constant 0 : index
      %58 = vector.load %arg8[%c0_32, %c0_33] : memref<1x1xf32, #tpu.memory_space<vmem>>, vector<1x1xf32>
      tpu.vector_store %arg8[%c0_32, %c0_33], %57 {strides = array<i32>} : memref<1x1xf32, #tpu.memory_space<vmem>>, vector<1x1xf32>,
    } else {
    }
    return
  }
  func.func @transform_0(%arg0: i32) -> (i32, i32) {
    %c0_i32 = arith.constant 0 : i32
    %c0_i32_0 = arith.constant 0 : i32
    return %c0_i32, %arg0 : i32, i32
  }
  func.func @transform_1(%arg0: i32) -> (i32, i32) {
    %c0_i32 = arith.constant 0 : i32
    %c0_i32_0 = arith.constant 0 : i32
    %c0_i32_1 = arith.constant 0 : i32
    return %c0_i32, %c0_i32_0 : i32, i32
  }
  func.func @transform_2(%arg0: i32) -> (i32, i32) {
    %c0_i32 = arith.constant 0 : i32
    %c0_i32_0 = arith.constant 0 : i32
    %c0_i32_1 = arith.constant 0 : i32
    return %c0_i32, %c0_i32_0 : i32, i32
  }
  func.func @transform_3(%arg0: i32) -> (i32, i32) {
    %c0_i32 = arith.constant 0 : i32
    %c0_i32_0 = arith.constant 0 : i32
    %c0_i32_1 = arith.constant 0 : i32
    return %c0_i32, %c0_i32_0 : i32, i32
  }
  func.func @transform_4(%arg0: i32) -> (i32, i32) {
    %c0_i32 = arith.constant 0 : i32
    %c0_i32_0 = arith.constant 0 : i32
    return %c0_i32, %arg0 : i32, i32
  }
  func.func @transform_5(%arg0: i32) -> (i32, i32) {
    %c0_i32 = arith.constant 0 : i32
    %c0_i32_0 = arith.constant 0 : i32
    return %c0_i32, %arg0 : i32, i32
  }
  func.func @transform_6(%arg0: i32) -> (i32, i32) {
    %c0_i32 = arith.constant 0 : i32
    %c0_i32_0 = arith.constant 0 : i32
    return %c0_i32, %arg0 : i32, i32
  }
  func.func @transform_7(%arg0: i32) -> (i32, i32) {
    %c0_i32 = arith.constant 0 : i32
    %c0_i32_0 = arith.constant 0 : i32
    %c0_i32_1 = arith.constant 0 : i32
    return %c0_i32, %c0_i32_0 : i32, i32
  }
}

</mosaic_0001>

<llo_original>
// kernel: tpu_custom_call.1
$region0: #{tpu_custom_call.1}
  #allocation0 [shape = 'u32[]', space=smem, size = 0x4, offset = 0x4, fixed_abs, tag = 'smem constant byte address 0x4 - core index']
  #allocation1 [shape = 'u32[144,128]{1,0:T(1,128)}', space=vmem, size = 0x12000, scoped, tag = 'internal scratch']
  #allocation2 [shape = 'f32[1,1]{1,0:T(1,128)}', space=vmem, size = 0x200, scoped, tag = 'scratch operand']
  %s0 = inlined_call_operand.vmem [shape: bf16[32,128], index: 0, kind: input, shape index: {}]
  %s1 = inlined_call_operand.vmem [shape: bf16[64,32], index: 1, kind: input, shape index: {}]
  %s2 = inlined_call_operand.vmem [shape: f32[64,1], index: 2, kind: input, shape index: {}]
  %s3 = inlined_call_operand.vmem [shape: bf16[16,64], index: 3, kind: input, shape index: {}]
  %s4 = inlined_call_operand.vmem [shape: bf16[64,128], index: 4, kind: input, shape index: {}]
  %s5 = inlined_call_operand.hbm [shape: f32[16,128], index: 5, kind: output, shape index: {0}]
  %s6 = inlined_call_operand.hbm [shape: s32[1,128], index: 6, kind: output, shape index: {1}]
  %s7 = inlined_call_operand.hbm [shape: f32[1,1], index: 7, kind: output, shape index: {2}]
  %8 = xla_tuple %s5, %s6, %s7
  %s9 = sld [smem:[#allocation0]]
  $region54: #{tpu_custom_call.1} parent=0
    _
  %s11 = ssub.s32 1, %s9
  %s12 = scalar_select 0, %s11, %s9
  $region1: #{tpu_custom_call.1} parent=0
    #allocation3 [shape = 'u8[8192]{0}', space=vmem, size = 0x2000, scoped, tag = 'output window, operand 0, single buffered']
    #allocation4 [shape = 's32[1]{0}', space=sflag, size = 0x4, scoped, tag = 'scoped memory for tpu_custom_call.1']
    #allocation5 [shape = 'u8[512]{0}', space=vmem, size = 0x400, scoped, tag = 'output window, operand 1, single buffered']
    #allocation6 [shape = 's32[1]{0}', space=sflag, size = 0x4, scoped, tag = 'scoped memory for tpu_custom_call.1']
    #allocation7 [shape = 'u8[512]{0}', space=vmem, size = 0x400, scoped, tag = 'output window, operand 2, single buffered']
    %13 = vsyncpa [#allocation4], 0
    %14 = vsyncpa [#allocation6], 0
    // Predicated region
    $region2: #{tpu_custom_call.1} parent=1 // pred_check
      _
    $region3: #{tpu_custom_call.1} parent=1 // pred_check_branch
      %16 = sbr.rel (0) target = $region5
    $region4: #{tpu_custom_call.1} parent=1 // pred_region
      _
    $region5: #{tpu_custom_call.1} parent=1 // pred_fallthru
      _
    // Predicated region
    $region6: #{tpu_custom_call.1} parent=1 // pred_check
      _
    $region7: #{tpu_custom_call.1} parent=1 // pred_check_branch
      %18 = sbr.rel (0) target = $region9
    $region8: #{tpu_custom_call.1} parent=1 // pred_region
      _
    $region9: #{tpu_custom_call.1} parent=1 // pred_fallthru
      _
    // Predicated region
    $region10: #{tpu_custom_call.1} parent=1 // pred_check
      _
    $region11: #{tpu_custom_call.1} parent=1 // pred_check_branch
      %20 = sbr.rel (0) target = $region13
    $region12: #{tpu_custom_call.1} parent=1 // pred_region
      _
    $region13: #{tpu_custom_call.1} parent=1 // pred_fallthru
      _
    // Predicated region
    $region14: #{tpu_custom_call.1} parent=1 // pred_check
      _
    $region15: #{tpu_custom_call.1} parent=1 // pred_check_branch
      %22 = sbr.rel (0) target = $region17
    $region16: #{tpu_custom_call.1} parent=1 // pred_region
      _
    $region17: #{tpu_custom_call.1} parent=1 // pred_fallthru
      _
    // Predicated region
    $region18: #{tpu_custom_call.1} parent=1 // pred_check
      _
    $region19: #{tpu_custom_call.1} parent=1 // pred_check_branch
      %24 = sbr.rel (0) target = $region21
    $region20: #{tpu_custom_call.1} parent=1 // pred_region
      _
    $region21: #{tpu_custom_call.1} parent=1 // pred_fallthru
      _
    %v26 = vld [vmem:[%s1] sm:$0xf]
    %v27 = vld [vmem:[%s1 + $0x4] sm:$0xf]
    %v28 = vld [vmem:[%s1 + $0x8] sm:$0xf]
    %v29 = vld [vmem:[%s1 + $0xc] sm:$0xf]
    %v30 = vld [vmem:[%s1 + $0x10] sm:$0xf]
    %v31 = vld [vmem:[%s1 + $0x14] sm:$0xf]
    %v32 = vld [vmem:[%s1 + $0x18] sm:$0xf]
    %v33 = vld [vmem:[%s1 + $0x1c] sm:$0xf]
    %v34 = vld [vmem:[%s0] sm:$0xf]
    %v35 = vld [vmem:[%s0 + $0x4] sm:$0xf]
    %v36 = vld [vmem:[%s0 + $0x8] sm:$0xf]
    %v37 = vld [vmem:[%s0 + $0xc] sm:$0xf]
    %v38 = vld [vmem:[%s2] sm:$0xff]
    %v39 = vld [vmem:[%s2 + $0x8] sm:$0xff]
    %v40 = vld [vmem:[%s2 + $0x10] sm:$0xff]
    %v41 = vld [vmem:[%s2 + $0x18] sm:$0xff]
    %v42 = vld [vmem:[%s2 + $0x20] sm:$0xff]
    %v43 = vld [vmem:[%s2 + $0x28] sm:$0xff]
    %v44 = vld [vmem:[%s2 + $0x30] sm:$0xff]
    %v45 = vld [vmem:[%s2 + $0x38] sm:$0xff]
    %47 = vset.pattern.permute.xlu0 0
    %48 = vperm.xlu0 %47, %v38
    %v49 = vpop.permute.xlu0 %48
    %52 = vset.pattern.permute.xlu0 0
    %53 = vperm.xlu0 %52, %v39
    %v54 = vpop.permute.xlu0 %53
    %57 = vset.pattern.permute.xlu0 0
    %58 = vperm.xlu0 %57, %v40
    %v59 = vpop.permute.xlu0 %58
    %62 = vset.pattern.permute.xlu0 0
    %63 = vperm.xlu0 %62, %v41
    %v64 = vpop.permute.xlu0 %63
    %67 = vset.pattern.permute.xlu0 0
    %68 = vperm.xlu0 %67, %v42
    %v69 = vpop.permute.xlu0 %68
    %72 = vset.pattern.permute.xlu0 0
    %73 = vperm.xlu0 %72, %v43
    %v74 = vpop.permute.xlu0 %73
    %77 = vset.pattern.permute.xlu0 0
    %78 = vperm.xlu0 %77, %v44
    %v79 = vpop.permute.xlu0 %78
    %82 = vset.pattern.permute.xlu0 0
    %83 = vperm.xlu0 %82, %v45
    %v84 = vpop.permute.xlu0 %83
    %v94 = vunpack.c.l.b16 %v26
    %v95 = vunpack.c.l.b16 %v27
    %v96 = vunpack.c.l.b16 %v28
    %v97 = vunpack.c.l.b16 %v29
    %v98 = vunpack.c.l.b16 %v30
    %v99 = vunpack.c.l.b16 %v31
    %v100 = vunpack.c.l.b16 %v32
    %v101 = vunpack.c.l.b16 %v33
    %v102 = vpack.c.b16 %v95, %v94
    %v103 = vpack.c.b16 %v97, %v96
    %v104 = vpack.c.b16 %v99, %v98
    %v105 = vpack.c.b16 %v101, %v100
    %v110 = vunpack.c.l.b16 %v34
    %v111 = vunpack.c.l.b16 %v35
    %v112 = vunpack.c.l.b16 %v36
    %v113 = vunpack.c.l.b16 %v37
    %v114 = vpack.c.b16 %v111, %v110
    %v115 = vpack.c.b16 %v113, %v112
    %vm118 = vcmask 261120
    %v120 = vsel %vm118, %v102, 0
    %v123 = vsel %vm118, %v103, 0
    %v126 = vsel %vm118, %v104, 0
    %v129 = vsel %vm118, %v105, 0
    %131 = vmatprep.subr.bf16.mxu0 0
    %132 = vmatpush1.bf16.msra.mxu0 0
    %133 = vmatprep.subr.bf16.mxu0 0
    %134 = vmatpush1.bf16.msra.mxu0 0
    %135 = vmatprep.subr.bf16.mxu0 0
    %136 = vmatpush1.bf16.msra.mxu0 0
    %137 = vmatprep.subr.bf16.mxu0 0
    %138 = vmatpush1.bf16.msra.mxu0 0
    %139 = vmatprep.subr.bf16.mxu0 0
    %140 = vmatpush1.bf16.msra.mxu0 0
    %141 = vmatprep.subr.bf16.mxu0 0
    %142 = vmatpush1.bf16.msra.mxu0 0
    %143 = vmatprep.subr.bf16.mxu0 0
    %144 = vmatpush1.bf16.msra.mxu0 %v115
    %145 = vmatprep.subr.bf16.mxu0 0
    %146 = vmatpush1.bf16.msra.mxu0 %v114
    %147 = vmatprep.subr.bf16.mxu0 0
    %148 = vmatpush2.bf16.msra.mxu0 0
    %149 = vmatprep.subr.bf16.mxu0 0
    %150 = vmatpush2.bf16.msra.mxu0 0
    %151 = vmatprep.subr.bf16.mxu0 0
    %152 = vmatpush2.bf16.msra.mxu0 0
    %153 = vmatprep.subr.bf16.mxu0 0
    %154 = vmatpush2.bf16.msra.mxu0 0
    %155 = vmatprep.subr.bf16.mxu0 0
    %156 = vmatpush2.bf16.msra.mxu0 0
    %157 = vmatprep.subr.bf16.mxu0 0
    %158 = vmatpush2.bf16.msra.mxu0 0
    %159 = vmatprep.subr.bf16.mxu0 0
    %160 = vmatpush2.bf16.msra.mxu0 0
    %161 = vmatprep.subr.bf16.mxu0 0
    %162 = vmatpush2.bf16.msra.mxu0 0
    %163 = vmatprep.mubr.bf16.mxu0 0
    %164 = vmatmul.mubr.bf16.gmra.mxu0 %v120
    %v165 = vpop.f32.mrf.mxu0
    %v166 = vadd.f32 %v49, %v165
    %v167 = vpop.f32.mrf.mxu0
    %v168 = vpop.f32.mrf.mxu0
    %v169 = vadd.f32 %v54, %v168
    %v170 = vpop.f32.mrf.mxu0
    %171 = vmatprep.mubr.bf16.mxu0 0
    %172 = vmatmul.mubr.bf16.gmra.mxu0 %v123
    %v173 = vpop.f32.mrf.mxu0
    %v174 = vadd.f32 %v59, %v173
    %v175 = vpop.f32.mrf.mxu0
    %v176 = vpop.f32.mrf.mxu0
    %v177 = vadd.f32 %v64, %v176
    %v178 = vpop.f32.mrf.mxu0
    %179 = vmatprep.mubr.bf16.mxu0 0
    %180 = vmatmul.mubr.bf16.gmra.mxu0 %v126
    %v181 = vpop.f32.mrf.mxu0
    %v182 = vadd.f32 %v69, %v181
    %v183 = vpop.f32.mrf.mxu0
    %v184 = vpop.f32.mrf.mxu0
    %v185 = vadd.f32 %v74, %v184
    %v186 = vpop.f32.mrf.mxu0
    %187 = vmatprep.mubr.bf16.mxu0 0
    %188 = vmatmul.mubr.bf16.gmra.mxu0 %v129
    %v189 = vpop.f32.mrf.mxu0
    %v190 = vadd.f32 %v79, %v189
    %v191 = vpop.f32.mrf.mxu0
    %v192 = vpop.f32.mrf.mxu0
    %v193 = vadd.f32 %v84, %v192
    %v194 = vpop.f32.mrf.mxu0
    %195 = vdwg.mxu0
    %v196 = vld [vmem:[%s4] sm:$0xf]
    %v197 = vld [vmem:[%s4 + $0x4] sm:$0xf]
    %v198 = vld [vmem:[%s4 + $0x8] sm:$0xf]
    %v199 = vld [vmem:[%s4 + $0xc] sm:$0xf]
    %v200 = vld [vmem:[%s4 + $0x10] sm:$0xf]
    %v201 = vld [vmem:[%s4 + $0x14] sm:$0xf]
    %v202 = vld [vmem:[%s4 + $0x18] sm:$0xf]
    %v203 = vld [vmem:[%s4 + $0x1c] sm:$0xf]
    %v204 = vunpack.c.l.bf16 %v196
    %v205 = vunpack.c.l.bf16 %v197
    %v206 = vunpack.c.l.bf16 %v198
    %v207 = vunpack.c.l.bf16 %v199
    %v208 = vunpack.c.l.bf16 %v200
    %v209 = vunpack.c.l.bf16 %v201
    %v210 = vunpack.c.l.bf16 %v202
    %v211 = vunpack.c.l.bf16 %v203
    %v212 = vadd.f32 %v166, %v204
    %v213 = vadd.f32 %v169, %v205
    %v214 = vadd.f32 %v174, %v206
    %v215 = vadd.f32 %v177, %v207
    %v216 = vadd.f32 %v182, %v208
    %v217 = vadd.f32 %v185, %v209
    %v218 = vadd.f32 %v190, %v210
    %v219 = vadd.f32 %v193, %v211
    %v220 = vmax.f32 %v212, %v216
    %v221 = vmax.f32 %v213, %v217
    %v222 = vmax.f32 %v214, %v218
    %v223 = vmax.f32 %v215, %v219
    %v224 = vmax.f32 %v220, %v221
    %v225 = vmax.f32 %v222, %v223
    %v226 = vmax.f32 %v224, %v225
    %v227 = vrot.slane %v226, 4
    %v228 = vmax.f32 %v226, %v227
    %v229 = vrot.slane %v228, 2
    %v230 = vmax.f32 %v228, %v229
    %v231 = vrot.slane %v230, 1
    %v232 = vmax.f32 %v230, %v231
    %v233 = vlaneseq
    %v234 = vshrl.u32 %v233, 7
    %v235 = vadd.s32 %v234, 8
    %v236 = vadd.s32 %v234, 16
    %v237 = vadd.s32 %v234, 24
    %v238 = vadd.s32 %v234, 32
    %v239 = vadd.s32 %v234, 40
    %v240 = vadd.s32 %v234, 48
    %v241 = vadd.s32 %v234, 56
    %vm242 = vcmp.eq.f32.partialorder %v212, %v232
    %vm243 = vcmp.eq.f32.partialorder %v213, %v232
    %vm244 = vcmp.eq.f32.partialorder %v214, %v232
    %vm245 = vcmp.eq.f32.partialorder %v215, %v232
    %vm246 = vcmp.eq.f32.partialorder %v216, %v232
    %vm247 = vcmp.eq.f32.partialorder %v217, %v232
    %vm248 = vcmp.eq.f32.partialorder %v218, %v232
    %vm249 = vcmp.eq.f32.partialorder %v219, %v232
    %v250 = vsel %vm242, %v234, 64
    %v251 = vsel %vm243, %v235, 64
    %v252 = vsel %vm244, %v236, 64
    %v253 = vsel %vm245, %v237, 64
    %v254 = vsel %vm246, %v238, 64
    %v255 = vsel %vm247, %v239, 64
    %v256 = vsel %vm248, %v240, 64
    %v257 = vsel %vm249, %v241, 64
    %vm258 = vcmp.lt.s32.totalorder %v250, %v254
    %v259 = vsel %vm258, %v250, %v254
    %vm260 = vcmp.lt.s32.totalorder %v251, %v255
    %v261 = vsel %vm260, %v251, %v255
    %vm262 = vcmp.lt.s32.totalorder %v252, %v256
    %v263 = vsel %vm262, %v252, %v256
    %vm264 = vcmp.lt.s32.totalorder %v253, %v257
    %v265 = vsel %vm264, %v253, %v257
    %vm266 = vcmp.lt.s32.totalorder %v259, %v261
    %v267 = vsel %vm266, %v259, %v261
    %vm268 = vcmp.lt.s32.totalorder %v263, %v265
    %v269 = vsel %vm268, %v263, %v265
    %vm270 = vcmp.lt.s32.totalorder %v267, %v269
    %v271 = vsel %vm270, %v267, %v269
    %v272 = vrot.slane %v271, 4
    %vm273 = vcmp.lt.s32.totalorder %v271, %v272
    %v274 = vsel %vm273, %v271, %v272
    %v275 = vrot.slane %v274, 2
    %vm276 = vcmp.lt.s32.totalorder %v274, %v275
    %v277 = vsel %vm276, %v274, %v275
    %v278 = vrot.slane %v277, 1
    %vm279 = vcmp.lt.s32.totalorder %v277, %v278
    %v280 = vsel %vm279, %v277, %v278
    %vm281 = vcmp.eq.s32.totalorder %v234, %v280
    %vm282 = vcmp.eq.s32.totalorder %v235, %v280
    %vm283 = vcmp.eq.s32.totalorder %v236, %v280
    %vm284 = vcmp.eq.s32.totalorder %v237, %v280
    %vm285 = vcmp.eq.s32.totalorder %v238, %v280
    %vm286 = vcmp.eq.s32.totalorder %v239, %v280
    %vm287 = vcmp.eq.s32.totalorder %v240, %v280
    %vm288 = vcmp.eq.s32.totalorder %v241, %v280
    %v289 = vsel %vm281, 1, 0
    %v290 = vsel %vm282, 1, 0
    %v291 = vsel %vm283, 1, 0
    %v292 = vsel %vm284, 1, 0
    %v293 = vsel %vm285, 1, 0
    %v294 = vsel %vm286, 1, 0
    %v295 = vsel %vm287, 1, 0
    %v296 = vsel %vm288, 1, 0
    %v297 = vcvt.s32.f32 %v289
    %v298 = vcvt.s32.f32 %v290
    %v299 = vcvt.s32.f32 %v291
    %v300 = vcvt.s32.f32 %v292
    %v301 = vcvt.s32.f32 %v293
    %v302 = vcvt.s32.f32 %v294
    %v303 = vcvt.s32.f32 %v295
    %v304 = vcvt.s32.f32 %v296
    %v305 = vpack.c.bf16 %v298, %v297
    %v306 = vpack.c.bf16 %v300, %v299
    %v307 = vpack.c.bf16 %v302, %v301
    %v308 = vpack.c.bf16 %v304, %v303
    %v309 = vld [vmem:[%s3] sm:$0xf]
    %v310 = vld [vmem:[%s3 + $0x4] sm:$0xf]
    %v313 = vunpack.c.l.b16 %v309
    %v314 = vunpack.c.l.b16 %v310
    %v315 = vpack.c.b16 %v314, %v313
    %vm316 = vcmask 523264
    %v318 = vsel %vm316, %v315, 0
    %320 = vmatprep.subr.bf16.mxu0 0
    %321 = vmatpush1.bf16.msra.mxu0 0
    %322 = vmatprep.subr.bf16.mxu0 0
    %323 = vmatpush1.bf16.msra.mxu0 0
    %324 = vmatprep.subr.bf16.mxu0 0
    %325 = vmatpush1.bf16.msra.mxu0 0
    %326 = vmatprep.subr.bf16.mxu0 0
    %327 = vmatpush1.bf16.msra.mxu0 0
    %328 = vmatprep.subr.bf16.mxu0 0
    %329 = vmatpush1.bf16.msra.mxu0 %v308
    %330 = vmatprep.subr.bf16.mxu0 0
    %331 = vmatpush1.bf16.msra.mxu0 %v307
    %332 = vmatprep.subr.bf16.mxu0 0
    %333 = vmatpush1.bf16.msra.mxu0 %v306
    %334 = vmatprep.subr.bf16.mxu0 0
    %335 = vmatpush1.bf16.msra.mxu0 %v305
    %336 = vmatprep.subr.bf16.mxu0 0
    %337 = vmatpush2.bf16.msra.mxu0 0
    %338 = vmatprep.subr.bf16.mxu0 0
    %339 = vmatpush2.bf16.msra.mxu0 0
    %340 = vmatprep.subr.bf16.mxu0 0
    %341 = vmatpush2.bf16.msra.mxu0 0
    %342 = vmatprep.subr.bf16.mxu0 0
    %343 = vmatpush2.bf16.msra.mxu0 0
    %344 = vmatprep.subr.bf16.mxu0 0
    %345 = vmatpush2.bf16.msra.mxu0 0
    %346 = vmatprep.subr.bf16.mxu0 0
    %347 = vmatpush2.bf16.msra.mxu0 0
    %348 = vmatprep.subr.bf16.mxu0 0
    %349 = vmatpush2.bf16.msra.mxu0 0
    %350 = vmatprep.subr.bf16.mxu0 0
    %351 = vmatpush2.bf16.msra.mxu0 0
    %352 = vmatprep.mubr.bf16.mxu0 0
    %353 = vmatmul.mubr.bf16.gmra.mxu0 %v318
    %v354 = vpop.f32.mrf.mxu0
    %v355 = vadd.f32 0.0, %v354
    %v356 = vpop.f32.mrf.mxu0
    %v357 = vpop.f32.mrf.mxu0
    %v358 = vadd.f32 0.0, %v357
    %v359 = vpop.f32.mrf.mxu0
    %360 = vdwg.mxu0
    %361 = vst [vmem:[#allocation3] sm:$0xff] %v355
    %362 = vst [vmem:[#allocation3 + $0x8] sm:$0xff] %v358
    %363 = vst [vmem:[#allocation5] sm:$0x1] %v280
    %v364 = vmax.f32 %v166, %v182
    %v365 = vmax.f32 %v169, %v185
    %v366 = vmax.f32 %v174, %v190
    %v367 = vmax.f32 %v177, %v193
    %v368 = vmax.f32 %v364, %v365
    %v369 = vmax.f32 %v366, %v367
    %v370 = vmax.f32 %v368, %v369
    %v371 = vrot.slane %v370, 4
    %v372 = vmax.f32 %v370, %v371
    %v373 = vrot.slane %v372, 2
    %v374 = vmax.f32 %v372, %v373
    %v375 = vrot.slane %v374, 1
    %v376 = vmax.f32 %v374, %v375
    %v377 = vsub.f32 %v166, %v376
    %v378 = vsub.f32 %v169, %v376
    %v379 = vsub.f32 %v174, %v376
    %v380 = vsub.f32 %v177, %v376
    %v381 = vsub.f32 %v182, %v376
    %v382 = vsub.f32 %v185, %v376
    %v383 = vsub.f32 %v190, %v376
    %v384 = vsub.f32 %v193, %v376
    %v385 = vmul.f32 %v377, 1.442695
    %v386 = vpow.pop %v385
    %v387 = vmul.f32 %v378, 1.442695
    %v388 = vpow.pop %v387
    %v389 = vmul.f32 %v379, 1.442695
    %v390 = vpow.pop %v389
    %v391 = vmul.f32 %v380, 1.442695
    %v392 = vpow.pop %v391
    %v393 = vmul.f32 %v381, 1.442695
    %v394 = vpow.pop %v393
    %v395 = vmul.f32 %v382, 1.442695
    %v396 = vpow.pop %v395
    %v397 = vmul.f32 %v383, 1.442695
    %v398 = vpow.pop %v397
    %v399 = vmul.f32 %v384, 1.442695
    %v400 = vpow.pop %v399
    %v401 = vadd.f32 %v386, %v388
    %v402 = vadd.f32 %v401, %v390
    %v403 = vadd.f32 %v402, %v392
    %v404 = vadd.f32 %v403, %v394
    %v405 = vadd.f32 %v404, %v396
    %v406 = vadd.f32 %v405, %v398
    %v407 = vadd.f32 %v406, %v400
    %v408 = vrot.slane %v407, 4
    %v409 = vadd.f32 %v407, %v408
    %v410 = vrot.slane %v409, 2
    %v411 = vadd.f32 %v409, %v410
    %v412 = vrot.slane %v411, 1
    %v413 = vadd.f32 %v411, %v412
    %v414 = vrcp.pop %v413
    %v415 = vmul.f32 %v386, %v414
    %v416 = vmul.f32 %v388, %v414
    %v417 = vmul.f32 %v390, %v414
    %v418 = vmul.f32 %v392, %v414
    %v419 = vmul.f32 %v394, %v414
    %v420 = vmul.f32 %v396, %v414
    %v421 = vmul.f32 %v398, %v414
    %v422 = vmul.f32 %v400, %v414
    %v423 = vmul.f32 %v415, 64.0
    %v424 = vmul.f32 %v416, 64.0
    %v425 = vmul.f32 %v417, 64.0
    %v426 = vmul.f32 %v418, 64.0
    %v427 = vmul.f32 %v419, 64.0
    %v428 = vmul.f32 %v420, 64.0
    %v429 = vmul.f32 %v421, 64.0
    %v430 = vmul.f32 %v422, 64.0
    %v431 = vadd.f32 %v423, 1e-10
    %v432 = vadd.f32 %v424, 1e-10
    %v433 = vadd.f32 %v425, 1e-10
    %v434 = vadd.f32 %v426, 1e-10
    %v435 = vadd.f32 %v427, 1e-10
    %v436 = vadd.f32 %v428, 1e-10
    %v437 = vadd.f32 %v429, 1e-10
    %v438 = vadd.f32 %v430, 1e-10
    %v439 = vlog2.pop %v431
    %v440 = vmul.f32 %v439, 0.6931472
    %v441 = vlog2.pop %v432
    %v442 = vmul.f32 %v441, 0.6931472
    %v443 = vlog2.pop %v433
    %v444 = vmul.f32 %v443, 0.6931472
    %v445 = vlog2.pop %v434
    %v446 = vmul.f32 %v445, 0.6931472
    %v447 = vlog2.pop %v435
    %v448 = vmul.f32 %v447, 0.6931472
    %v449 = vlog2.pop %v436
    %v450 = vmul.f32 %v449, 0.6931472
    %v451 = vlog2.pop %v437
    %v452 = vmul.f32 %v451, 0.6931472
    %v453 = vlog2.pop %v438
    %v454 = vmul.f32 %v453, 0.6931472
    %v455 = vmul.f32 %v415, %v440
    %v456 = vmul.f32 %v416, %v442
    %v457 = vmul.f32 %v417, %v444
    %v458 = vmul.f32 %v418, %v446
    %v459 = vmul.f32 %v419, %v448
    %v460 = vmul.f32 %v420, %v450
    %v461 = vmul.f32 %v421, %v452
    %v462 = vmul.f32 %v422, %v454
    %v463 = vadd.f32 %v455, %v456
    %v464 = vadd.f32 %v463, %v457
    %v465 = vadd.f32 %v464, %v458
    %v466 = vadd.f32 %v465, %v459
    %v467 = vadd.f32 %v466, %v460
    %v468 = vadd.f32 %v467, %v461
    %v469 = vadd.f32 %v468, %v462
    %v470 = vrot.slane %v469, 4
    %v471 = vadd.f32 %v469, %v470
    %v472 = vrot.slane %v471, 2
    %v473 = vadd.f32 %v471, %v472
    %v474 = vrot.slane %v473, 1
    %v475 = vadd.f32 %v473, %v474
    %476 = vadd.xlane.f32.xlu0 %v475
    %v477 = vpop.xlane.xlu0 %476
    %p478 = scmp.eq.s32.totalorder 0, 0
    // Predicated region
    $region22: #{tpu_custom_call.1} parent=1 // pred_check
      %p479 = pneg %p478
    $region23: #{tpu_custom_call.1} parent=1 // pred_check_branch
      %481 = sbr.rel (%p479) target = $region25
    $region24: #{tpu_custom_call.1} parent=1 // pred_region
      %vm482 = vcmask 0
      %483 = vst.msk [vmem:[#allocation2] sm:$0x1] %vm482, 0.0
    $region25: #{tpu_custom_call.1} parent=1 // pred_fallthru
      _
    %v484 = vld [vmem:[#allocation2] sm:$0x1]
    %v485 = vadd.f32 %v484, %v477
    %vm486 = vcmask 0
    %487 = vst.msk [vmem:[#allocation2] sm:$0x1] %vm486, %v485
    // Predicated region
    $region26: #{tpu_custom_call.1} parent=1 // pred_check
      %p488 = pneg %p478
    $region27: #{tpu_custom_call.1} parent=1 // pred_check_branch
      %490 = sbr.rel (%p488) target = $region29
    $region28: #{tpu_custom_call.1} parent=1 // pred_region
      %v491 = vld [vmem:[#allocation2] sm:$0x1]
      %v492 = vmul.f32 %v491, 3.90625e-06
      %493 = vst.msk [vmem:[#allocation7] sm:$0x1] %vm486, %v492
    $region29: #{tpu_custom_call.1} parent=1 // pred_fallthru
      _
    // Predicated region
    $region30: #{tpu_custom_call.1} parent=1 // pred_check
      _
    $region31: #{tpu_custom_call.1} parent=1 // pred_check_branch
      %495 = sbr.rel (0) target = $region33
    $region32: #{tpu_custom_call.1} parent=1 // pred_region
      %s497 = ssub.s32 256, 256
      %498 = vsyncadd [#allocation4], %s497
      %s499 = sshll.u32 [#allocation3], 4
      %s500 = int_to_ptr.vmem [resolvable:$true] %s499
      %505 = dma.vmem_to_hbm [thread:$0]  %s500, 256, %s5, [#allocation4], 128, 128, 8
    $region33: #{tpu_custom_call.1} parent=1 // pred_fallthru
      _
    // Predicated region
    $region34: #{tpu_custom_call.1} parent=1 // pred_check
      _
    $region35: #{tpu_custom_call.1} parent=1 // pred_check_branch
      %507 = sbr.rel (0) target = $region37
    $region36: #{tpu_custom_call.1} parent=1 // pred_region
      %s509 = ssub.s32 16, 16
      %510 = vsyncadd [#allocation6], %s509
      %s512 = sshll.u32 [#allocation5], 4
      %s513 = int_to_ptr.vmem [resolvable:$true] %s512
      %515 = dma.vmem_to_hbm [thread:$0]  %s513, 16, %s6, [#allocation6]
    $region37: #{tpu_custom_call.1} parent=1 // pred_fallthru
      _
    // Predicated region
    $region38: #{tpu_custom_call.1} parent=1 // pred_check
      _
    $region39: #{tpu_custom_call.1} parent=1 // pred_check_branch
      %517 = sbr.rel (0) target = $region41
    $region40: #{tpu_custom_call.1} parent=1 // pred_region
      %s519 = ssub.s32 16, 16
      %520 = vsyncadd [#allocation6], %s519
      %s522 = sshll.u32 [#allocation7], 4
      %s523 = int_to_ptr.vmem [resolvable:$true] %s522
      %525 = dma.vmem_to_hbm [thread:$0]  %s523, 16, %s7, [#allocation6]
    $region41: #{tpu_custom_call.1} parent=1 // pred_fallthru
      _
    // Predicated region
    $region42: #{tpu_custom_call.1} parent=1 // pred_check
      _
    $region43: #{tpu_custom_call.1} parent=1 // pred_check_branch
      %527 = sbr.rel (0) target = $region45
    $region44: #{tpu_custom_call.1} parent=1 // pred_region
      %528 = dma.done [#allocation4], 256
    $region45: #{tpu_custom_call.1} parent=1 // pred_fallthru
      _
    // Predicated region
    $region46: #{tpu_custom_call.1} parent=1 // pred_check
      _
    $region47: #{tpu_custom_call.1} parent=1 // pred_check_branch
      %530 = sbr.rel (0) target = $region49
    $region48: #{tpu_custom_call.1} parent=1 // pred_region
      %531 = dma.done [#allocation6], 16
    $region49: #{tpu_custom_call.1} parent=1 // pred_fallthru
      _
    // Predicated region
    $region50: #{tpu_custom_call.1} parent=1 // pred_check
      _
    $region51: #{tpu_custom_call.1} parent=1 // pred_check_branch
      %533 = sbr.rel (0) target = $region53
    $region52: #{tpu_custom_call.1} parent=1 // pred_region
      %534 = dma.done [#allocation6], 16
    $region53: #{tpu_custom_call.1} parent=1 // pred_fallthru
      _
    %535 = vsyncpa [#allocation4], 1
    %536 = vsyncpa [#allocation6], 1

</llo_original>
